<compile_context>
chip_gen: v6e
topology: v6e:2x2x1
jax: 0.10.0
libtpu: 0.0.40
codegen_flags: <defaults>
</compile_context>

<pallas_src>
import math

import jax
import jax.numpy as jnp
import numpy as np
from jax.experimental import pallas as pl
from jax.experimental.pallas import tpu as pltpu

# ----------------------------- config ---------------------------------------
B = 2
T = 8
C = 32                                      # embed_size
NUM_HEADS = 4
NUM_KV_HEADS = 2
HEAD_DIM = C // NUM_HEADS                   # 8
NUM_KV_GROUPS = NUM_HEADS // NUM_KV_HEADS   # 2
FFN = int(C * 4)                            # expansion_ratio = 4 -> 128
EPS = 1e-5
ROPE_THETA = 10000.0

BT = B * T                                  # 16
HQ = NUM_HEADS * HEAD_DIM                   # 32
HK = NUM_KV_HEADS * HEAD_DIM                # 16


# ----------------------------- Pallas kernel --------------------------------
def block_kernel(x_ref, rope_ref, bd_ref, am_ref, w1_ref, wo_ref, wgu_ref,
                 wd_ref, o_ref):
    x = x_ref[...]                                            # (BT, C) f32

    # ---- RMSNorm 1 (ln1 weight + 1/sqrt(D) scale folded into w1) ----
    h = x * jax.lax.rsqrt(jnp.mean(x * x, axis=-1, keepdims=True) + EPS)

    # ---- fused [Q | K_rep | Q@P | K_rep@P | V_rep] projection: one MXU push
    proj = jnp.dot(h, w1_ref[...], preferred_element_type=jnp.float32)  # (BT, 160)
    rope = rope_ref[...]                                                # (BT, 128)

    # rotary for q and k_rep in one 64-lane-wide FMA:
    #   out = raw*cos + (raw@P)*sin, cos/sin pre-expanded & tiled per head slot
    qk = proj[:, :2 * HQ] * rope[:, :2 * HQ] + proj[:, 2 * HQ:4 * HQ] * rope[:, 2 * HQ:4 * HQ]
    q = qk[:, :HQ]                                    # (BT, HQ), already scaled
    k = qk[:, HQ:2 * HQ]                              # (BT, HQ), GQA-repeated
    v = proj[:, 4 * HQ:5 * HQ]                        # (BT, HQ), GQA-repeated

    # ---- causal GQA attention via register-resident block-diag expansion ---
    # bd[(hh, b', s'), hh*D:(hh+1)*D] = 1, else 0 (precomputed constant), so
    #   kbd/vbd = bd * tile(k/v) puts head hh's K/V rows in its own column
    #   block with pure vreg copies + VPU selects (no VMEM scratch round trip).
    bd = bd_ref[...]                                  # (H*BT, HQ)
    kbd = bd * jnp.concatenate([k] * NUM_HEADS, axis=0)
    vbd = bd * jnp.concatenate([v] * NUM_HEADS, axis=0)

    # scores for all heads in one matmul; additive causal+batch mask folded in
    s = jax.lax.dot_general(q, kbd, (((1,), (1,)), ((), ())),
                            preferred_element_type=jnp.float32) + am_ref[...]  # (BT, H*BT)

    # shared row-max shift is exact per head (shift cancels in the ratio);
    # safe here since logits are tiny (0.02-scale weights).
    m = jnp.max(s, axis=-1, keepdims=True)
    p = jnp.exp(s - m)                                # masked entries -> 0

    # per-head numerators AND denominators from two tiny MXU pushes on the
    # same LHS (denominator = p @ block-diag ones, broadcast over D lanes).
    o_un = jnp.dot(p, vbd, preferred_element_type=jnp.float32)   # (BT, HQ)
    den = jnp.dot(p, bd, preferred_element_type=jnp.float32)     # (BT, HQ)
    attn = o_un * pl.reciprocal(jnp.maximum(den, 1e-30), approx=True)

    x1 = x + jnp.dot(attn, wo_ref[...], preferred_element_type=jnp.float32)

    # ---- RMSNorm 2 (ln2 folded) + fused gated SiLU MLP ----
    h2 = x1 * jax.lax.rsqrt(jnp.mean(x1 * x1, axis=-1, keepdims=True) + EPS)
    gu = jnp.dot(h2, wgu_ref[...], preferred_element_type=jnp.float32)   # (BT, 2*FFN)
    g = gu[:, :FFN]                                   # 128-lane aligned slices
    u = gu[:, FFN:]
    ff = jnp.dot(g * jax.nn.sigmoid(g) * u, wd_ref[...],
                 preferred_element_type=jnp.float32)
    o_ref[...] = (x1 + ff).astype(o_ref.dtype)


# ----------------------------- one-time weight prep --------------------------
def _pair_swap(n_heads):
    """Signed pair-swap permutation: y[2i] = -x[2i+1], y[2i+1] = x[2i]."""
    p_blk = np.zeros((HEAD_DIM, HEAD_DIM), np.float32)
    for i in range(HEAD_DIM // 2):
        p_blk[2 * i + 1, 2 * i] = -1.0
        p_blk[2 * i, 2 * i + 1] = 1.0
    return np.kron(np.eye(n_heads, dtype=np.float32), p_blk)


def _repeat_kv_cols(w):
    """(C, HK) -> (C, HQ): torch repeat_interleave over the kv-head axis."""
    return jnp.repeat(w.reshape(C, NUM_KV_HEADS, HEAD_DIM),
                      NUM_KV_GROUPS, axis=1).reshape(C, HQ)


def prepare_params(params, cos, sin):
    """Hoisted out of the per-call path: fused weights, rope table, masks."""
    scale = 1.0 / math.sqrt(HEAD_DIM)
    pq = jnp.asarray(_pair_swap(NUM_HEADS))           # (HQ, HQ)
    ln1 = params["ln1_w"][:, None]
    ln2 = params["ln2_w"][:, None]

    wq_s = ln1 * params["wq"] * scale                  # scale folded into Q
    wk_r = ln1 * _repeat_kv_cols(params["wk"])         # GQA repeat folded in
    wv_r = ln1 * _repeat_kv_cols(params["wv"])
    w1 = jnp.concatenate([wq_s, wk_r, wq_s @ pq, wk_r @ pq, wv_r], axis=1)  # (C, 160)
    wgu = jnp.concatenate([ln2 * params["wg"], ln2 * params["wu"]], axis=1)  # (C, 256)

    # rotary table, interleave-expanded & tiled to match [Q | K_rep] slots
    cos_e = jnp.repeat(cos, 2, axis=-1)                # (T, D)
    sin_e = jnp.repeat(sin, 2, axis=-1)
    rope = jnp.concatenate([jnp.tile(cos_e, (B, 2 * NUM_HEADS)),
                            jnp.tile(sin_e, (B, 2 * NUM_HEADS))], axis=1)   # (BT, 128)

    # block-diagonal per-head mask: bd[hh*BT + r, c] = 1 iff c in head hh's cols
    rr = np.arange(NUM_HEADS * BT)[:, None]
    cc = np.arange(HQ)[None, :]
    bdmask = (rr // BT == cc // HEAD_DIM).astype(np.float32)                 # (64, 32)

    # additive causal + same-batch mask over (query row, head-segment key)
    r = np.arange(BT)[:, None]
    n = np.arange(NUM_HEADS * BT)[None, :]
    key = n % BT
    valid = (r // T == key // T) & (key % T <= r % T)
    amask = np.where(valid, 0.0, -1e30).astype(np.float32)                   # (16, 64)

    return dict(w1=w1, wo=params["wo"], wgu=wgu, wd=params["wd"], rope=rope,
                bdmask=jnp.asarray(bdmask), amask=jnp.asarray(amask))


# ----------------------------- per-call wrapper ------------------------------
@jax.jit
def block_forward(x, prep):
    """x: (B, T, C) float32; prep: output of prepare_params()."""
    x2d = x.reshape(BT, C)
    inputs = (x2d, prep["rope"], prep["bdmask"], prep["amask"],
              prep["w1"], prep["wo"], prep["wgu"], prep["wd"])
    in_specs = [pl.BlockSpec(a.shape, lambda i: (0, 0)) for a in inputs]

    out = pl.pallas_call(
        block_kernel,
        out_shape=jax.ShapeDtypeStruct((BT, C), jnp.float32),
        grid=(1,),
        in_specs=in_specs,
        out_specs=pl.BlockSpec((BT, C), lambda i: (0, 0)),
        compiler_params=pltpu.CompilerParams(
            dimension_semantics=("arbitrary",)),
    )(*inputs)
    return out.reshape(B, T, C)


# ----------------------------- plain-JAX reference ---------------------------
def ref_block(x, params, cos, sin):
    def rmsnorm(v, w):
        return v * jax.lax.rsqrt(jnp.mean(v * v, -1, keepdims=True) + EPS) * w

    def rope(v):  # v: (B, H, T, D), interleaved pairs (matches torch complex)
        ve, vo = v[..., 0::2], v[..., 1::2]
        c, s = cos[None, None], sin[None, None]
        oe = ve * c - vo * s
        oo = ve * s + vo * c
        return jnp.stack([oe, oo], axis=-1).reshape(v.shape)

    h = rmsnorm(x, params["ln1_w"])
    q = (h @ params["wq"]).reshape(B, T, NUM_HEADS, HEAD_DIM).transpose(0, 2, 1, 3)
    k = (h @ params["wk"]).reshape(B, T, NUM_KV_HEADS, HEAD_DIM).transpose(0, 2, 1, 3)
    v = (h @ params["wv"]).reshape(B, T, NUM_KV_HEADS, HEAD_DIM).transpose(0, 2, 1, 3)
    q, k = rope(q), rope(k)
    k = jnp.repeat(k, NUM_KV_GROUPS, axis=1)
    v = jnp.repeat(v, NUM_KV_GROUPS, axis=1)
    s = jnp.einsum("bhqd,bhkd->bhqk", q, k) / math.sqrt(HEAD_DIM)
    mask = np.tril(np.ones((T, T), bool))
    s = jnp.where(mask[None, None], s, -jnp.inf)
    p = jax.nn.softmax(s, axis=-1)
    o = jnp.einsum("bhqk,bhkd->bhqd", p, v).transpose(0, 2, 1, 3).reshape(B, T, C)
    x1 = x + o @ params["wo"]
    h2 = rmsnorm(x1, params["ln2_w"])
    g = h2 @ params["wg"]
    u = h2 @ params["wu"]
    ff = (jax.nn.silu(g) * u) @ params["wd"]
    return x1 + ff


# ----------------------------- main ------------------------------------------
if __name__ == "__main__":
    key = jax.random.PRNGKey(0)
    ks = jax.random.split(key, 10)

    def winit(k, shape, std=0.02):
        return (std * jax.random.normal(k, shape)).astype(jnp.float32)

    params = {
        "ln1_w": jnp.ones((C,), jnp.float32),
        "ln2_w": jnp.ones((C,), jnp.float32),
        "wq": winit(ks[0], (C, NUM_HEADS * HEAD_DIM)),
        "wk": winit(ks[1], (C, NUM_KV_HEADS * HEAD_DIM)),
        "wv": winit(ks[2], (C, NUM_KV_HEADS * HEAD_DIM)),
        "wo": winit(ks[3], (C, C), std=0.02 / math.sqrt(2 * 2)),
        "wg": winit(ks[4], (C, FFN)),
        "wu": winit(ks[5], (C, FFN)),
        "wd": winit(ks[6], (FFN, C), std=0.02 / math.sqrt(2 * 2)),
    }

    x = jax.random.normal(ks[7], (B, T, C), jnp.float32)

    # rotary freqs (llama-style): freqs_cis[t, i] = exp(1j * t * theta^{-2i/D})
    inv_freq = 1.0 / (ROPE_THETA ** (np.arange(0, HEAD_DIM, 2) / HEAD_DIM))
    angles = np.arange(T)[:, None] * inv_freq[None, :]        # (T, D//2)
    cos = jnp.asarray(np.cos(angles), jnp.float32)
    sin = jnp.asarray(np.sin(angles), jnp.float32)

    prep = prepare_params(params, cos, sin)   # one-time, outside the hot path
    out = block_forward(x, prep)
    jax.block_until_ready(out)

    ref = ref_block(x, params, cos, sin)
    np.testing.assert_allclose(np.asarray(out), np.asarray(ref),
                               rtol=2e-4, atol=2e-4)
    print("KERNEL_OK")
</pallas_src>

<mosaic_0001>
module attributes {stable_mosaic.version = 11 : i64} {
  func.func @block_kernel(%arg0: i32, %arg1: memref<16x32xf32, #tpu.memory_space<vmem>>, %arg2: memref<16x128xf32, #tpu.memory_space<vmem>>, %arg3: memref<64x32xf32, #tpu.memory_space<vmem>>, %arg4: memref<16x64xf32, #tpu.memory_space<vmem>>, %arg5: memref<32x160xf32, #tpu.memory_space<vmem>>, %arg6: memref<32x32xf32, #tpu.memory_space<vmem>>, %arg7: memref<32x256xf32, #tpu.memory_space<vmem>>, %arg8: memref<128x32xf32, #tpu.memory_space<vmem>>, %arg9: memref<16x32xf32, #tpu.memory_space<vmem>>) attributes {dimension_semantics = [#tpu.dimension_semantics<arbitrary>], iteration_bounds = array<i64: 1>, scalar_prefetch = 0 : i64, scratch_operands = 0 : i64, tpu.core_type = #tpu.core_type<tc>, window_params = [{pipeline_mode = #tpu.pipeline_mode<synchronous>, transform_indices = @transform_0, window_bounds = array<i64: 16, 32>}, {pipeline_mode = #tpu.pipeline_mode<synchronous>, transform_indices = @transform_1, window_bounds = array<i64: 16, 128>}, {pipeline_mode = #tpu.pipeline_mode<synchronous>, transform_indices = @transform_2, window_bounds = array<i64: 64, 32>}, {pipeline_mode = #tpu.pipeline_mode<synchronous>, transform_indices = @transform_3, window_bounds = array<i64: 16, 64>}, {pipeline_mode = #tpu.pipeline_mode<synchronous>, transform_indices = @transform_4, window_bounds = array<i64: 32, 160>}, {pipeline_mode = #tpu.pipeline_mode<synchronous>, transform_indices = @transform_5, window_bounds = array<i64: 32, 32>}, {pipeline_mode = #tpu.pipeline_mode<synchronous>, transform_indices = @transform_6, window_bounds = array<i64: 32, 256>}, {pipeline_mode = #tpu.pipeline_mode<synchronous>, transform_indices = @transform_7, window_bounds = array<i64: 128, 32>}, {pipeline_mode = #tpu.pipeline_mode<synchronous>, transform_indices = @transform_8, window_bounds = array<i64: 16, 32>}]} {
    %c0 = arith.constant 0 : index
    %c0_0 = arith.constant 0 : index
    %0 = vector.load %arg1[%c0, %c0_0] : memref<16x32xf32, #tpu.memory_space<vmem>>, vector<16x32xf32>
    %1 = arith.mulf %0, %0 : vector<16x32xf32>
    %cst = arith.constant dense<0.000000e+00> : vector<16xf32>
    %2 = vector.multi_reduction <add>, %1, %cst [1] : vector<16x32xf32> to vector<16xf32>
    %3 = vector.shape_cast %2 : vector<16xf32> to vector<16x1xf32>
    %cst_1 = arith.constant 3.200000e+01 : f32
    %4 = vector.broadcast %cst_1 : f32 to vector<16x1xf32>
    %5 = arith.divf %3, %4 : vector<16x1xf32>
    %cst_2 = arith.constant 9.99999974E-6 : f32
    %6 = vector.broadcast %cst_2 : f32 to vector<16x1xf32>
    %7 = arith.addf %5, %6 : vector<16x1xf32>
    %8 = math.rsqrt %7 : vector<16x1xf32>
    %9 = vector.broadcast %8 : vector<16x1xf32> to vector<16x32xf32>
    %10 = arith.mulf %0, %9 : vector<16x32xf32>
    %c0_3 = arith.constant 0 : index
    %c0_4 = arith.constant 0 : index
    %11 = vector.load %arg5[%c0_3, %c0_4] : memref<32x160xf32, #tpu.memory_space<vmem>>, vector<32x160xf32>
    %cst_5 = arith.constant dense<0.000000e+00> : vector<16x160xf32>
    %12 = tpu.matmul %10, %11, %cst_5 {dimension_numbers = #tpu.dot_dimension_numbers<[1], [0], [0], [1], [0, 0, 1, 1], [], []>} : vector<16x32xf32>, vector<32x160xf32>, vector<16x160xf32> -> vector<16x160xf32>
    %c0_6 = arith.constant 0 : index
    %c0_7 = arith.constant 0 : index
    %13 = vector.load %arg2[%c0_6, %c0_7] : memref<16x128xf32, #tpu.memory_space<vmem>>, vector<16x128xf32>
    %14 = vector.extract_strided_slice %12 {offsets = [0, 0], sizes = [16, 64], strides = [1, 1]} : vector<16x160xf32> to vector<16x64xf32>
    %15 = vector.extract_strided_slice %13 {offsets = [0, 0], sizes = [16, 64], strides = [1, 1]} : vector<16x128xf32> to vector<16x64xf32>
    %16 = arith.mulf %14, %15 : vector<16x64xf32>
    %17 = vector.extract_strided_slice %12 {offsets = [0, 64], sizes = [16, 64], strides = [1, 1]} : vector<16x160xf32> to vector<16x64xf32>
    %18 = vector.extract_strided_slice %13 {offsets = [0, 64], sizes = [16, 64], strides = [1, 1]} : vector<16x128xf32> to vector<16x64xf32>
    %19 = arith.mulf %17, %18 : vector<16x64xf32>
    %20 = arith.addf %16, %19 : vector<16x64xf32>
    %21 = vector.extract_strided_slice %20 {offsets = [0, 0], sizes = [16, 32], strides = [1, 1]} : vector<16x64xf32> to vector<16x32xf32>
    %22 = vector.extract_strided_slice %20 {offsets = [0, 32], sizes = [16, 32], strides = [1, 1]} : vector<16x64xf32> to vector<16x32xf32>
    %23 = vector.extract_strided_slice %12 {offsets = [0, 128], sizes = [16, 32], strides = [1, 1]} : vector<16x160xf32> to vector<16x32xf32>
    %c0_8 = arith.constant 0 : index
    %c0_9 = arith.constant 0 : index
    %24 = vector.load %arg3[%c0_8, %c0_9] : memref<64x32xf32, #tpu.memory_space<vmem>>, vector<64x32xf32>
    %25 = tpu.concatenate %22, %22, %22, %22 in 0 : vector<16x32xf32>, vector<16x32xf32>, vector<16x32xf32>, vector<16x32xf32> -> vector<64x32xf32>
    %26 = arith.mulf %24, %25 : vector<64x32xf32>
    %27 = tpu.concatenate %23, %23, %23, %23 in 0 : vector<16x32xf32>, vector<16x32xf32>, vector<16x32xf32>, vector<16x32xf32> -> vector<64x32xf32>
    %28 = arith.mulf %24, %27 : vector<64x32xf32>
    %cst_10 = arith.constant dense<0.000000e+00> : vector<16x64xf32>
    %29 = tpu.matmul %21, %26, %cst_10 {dimension_numbers = #tpu.dot_dimension_numbers<[1], [1], [0], [0], [0, 0, 1, 0], [], []>} : vector<16x32xf32>, vector<64x32xf32>, vector<16x64xf32> -> vector<16x64xf32>
    %c0_11 = arith.constant 0 : index
    %c0_12 = arith.constant 0 : index
    %30 = vector.load %arg4[%c0_11, %c0_12] : memref<16x64xf32, #tpu.memory_space<vmem>>, vector<16x64xf32>
    %31 = arith.addf %29, %30 : vector<16x64xf32>
    %cst_13 = arith.constant dense<0xFF800000> : vector<16xf32>
    %32 = vector.multi_reduction <maximumf>, %31, %cst_13 [1] : vector<16x64xf32> to vector<16xf32>
    %33 = vector.shape_cast %32 : vector<16xf32> to vector<16x1xf32>
    %34 = vector.broadcast %33 : vector<16x1xf32> to vector<16x64xf32>
    %35 = arith.subf %31, %34 : vector<16x64xf32>
    %36 = math.exp %35 : vector<16x64xf32>
    %cst_14 = arith.constant dense<0.000000e+00> : vector<16x32xf32>
    %37 = tpu.matmul %36, %28, %cst_14 {dimension_numbers = #tpu.dot_dimension_numbers<[1], [0], [0], [1], [0, 0, 1, 1], [], []>} : vector<16x64xf32>, vector<64x32xf32>, vector<16x32xf32> -> vector<16x32xf32>
    %cst_15 = arith.constant dense<0.000000e+00> : vector<16x32xf32>
    %38 = tpu.matmul %36, %24, %cst_15 {dimension_numbers = #tpu.dot_dimension_numbers<[1], [0], [0], [1], [0, 0, 1, 1], [], []>} : vector<16x64xf32>, vector<64x32xf32>, vector<16x32xf32> -> vector<16x32xf32>
    %cst_16 = arith.constant 1.000000e-30 : f32
    %39 = vector.broadcast %cst_16 : f32 to vector<16x32xf32>
    %40 = arith.maximumf %38, %39 : vector<16x32xf32>
    %41 = tpu.reciprocal %40 {approx = true} : vector<16x32xf32> -> vector<16x32xf32>
    %42 = arith.mulf %37, %41 : vector<16x32xf32>
    %c0_17 = arith.constant 0 : index
    %c0_18 = arith.constant 0 : index
    %43 = vector.load %arg6[%c0_17, %c0_18] : memref<32x32xf32, #tpu.memory_space<vmem>>, vector<32x32xf32>
    %cst_19 = arith.constant dense<0.000000e+00> : vector<16x32xf32>
    %44 = tpu.matmul %42, %43, %cst_19 {dimension_numbers = #tpu.dot_dimension_numbers<[1], [0], [0], [1], [0, 0, 1, 1], [], []>} : vector<16x32xf32>, vector<32x32xf32>, vector<16x32xf32> -> vector<16x32xf32>
    %45 = arith.addf %0, %44 : vector<16x32xf32>
    %46 = arith.mulf %45, %45 : vector<16x32xf32>
    %cst_20 = arith.constant dense<0.000000e+00> : vector<16xf32>
    %47 = vector.multi_reduction <add>, %46, %cst_20 [1] : vector<16x32xf32> to vector<16xf32>
    %48 = vector.shape_cast %47 : vector<16xf32> to vector<16x1xf32>
    %cst_21 = arith.constant 3.200000e+01 : f32
    %49 = vector.broadcast %cst_21 : f32 to vector<16x1xf32>
    %50 = arith.divf %48, %49 : vector<16x1xf32>
    %cst_22 = arith.constant 9.99999974E-6 : f32
    %51 = vector.broadcast %cst_22 : f32 to vector<16x1xf32>
    %52 = arith.addf %50, %51 : vector<16x1xf32>
    %53 = math.rsqrt %52 : vector<16x1xf32>
    %54 = vector.broadcast %53 : vector<16x1xf32> to vector<16x32xf32>
    %55 = arith.mulf %45, %54 : vector<16x32xf32>
    %c0_23 = arith.constant 0 : index
    %c0_24 = arith.constant 0 : index
    %56 = vector.load %arg7[%c0_23, %c0_24] : memref<32x256xf32, #tpu.memory_space<vmem>>, vector<32x256xf32>
    %cst_25 = arith.constant dense<0.000000e+00> : vector<16x256xf32>
    %57 = tpu.matmul %55, %56, %cst_25 {dimension_numbers = #tpu.dot_dimension_numbers<[1], [0], [0], [1], [0, 0, 1, 1], [], []>} : vector<16x32xf32>, vector<32x256xf32>, vector<16x256xf32> -> vector<16x256xf32>
    %58 = vector.extract_strided_slice %57 {offsets = [0, 0], sizes = [16, 128], strides = [1, 1]} : vector<16x256xf32> to vector<16x128xf32>
    %59 = vector.extract_strided_slice %57 {offsets = [0, 128], sizes = [16, 128], strides = [1, 1]} : vector<16x256xf32> to vector<16x128xf32>
    %60 = arith.negf %58 : vector<16x128xf32>
    %61 = math.exp %60 : vector<16x128xf32>
    %cst_26 = arith.constant 1.000000e+00 : f32
    %62 = vector.broadcast %cst_26 : f32 to vector<16x128xf32>
    %63 = arith.addf %62, %61 : vector<16x128xf32>
    %64 = arith.divf %62, %63 : vector<16x128xf32>
    %65 = arith.mulf %58, %64 : vector<16x128xf32>
    %66 = arith.mulf %65, %59 : vector<16x128xf32>
    %c0_27 = arith.constant 0 : index
    %c0_28 = arith.constant 0 : index
    %67 = vector.load %arg8[%c0_27, %c0_28] : memref<128x32xf32, #tpu.memory_space<vmem>>, vector<128x32xf32>
    %cst_29 = arith.constant dense<0.000000e+00> : vector<16x32xf32>
    %68 = tpu.matmul %66, %67, %cst_29 {dimension_numbers = #tpu.dot_dimension_numbers<[1], [0], [0], [1], [0, 0, 1, 1], [], []>} : vector<16x128xf32>, vector<128x32xf32>, vector<16x32xf32> -> vector<16x32xf32>
    %69 = arith.addf %45, %68 : vector<16x32xf32>
    %c0_30 = arith.constant 0 : index
    %c0_31 = arith.constant 0 : index
    %70 = vector.load %arg9[%c0_30, %c0_31] : memref<16x32xf32, #tpu.memory_space<vmem>>, vector<16x32xf32>
    tpu.vector_store %arg9[%c0_30, %c0_31], %69 {strides = array<i32>} : memref<16x32xf32, #tpu.memory_space<vmem>>, vector<16x32xf32>,
    return
  }
  func.func @transform_0(%arg0: i32) -> (i32, i32) {
    %c0_i32 = arith.constant 0 : i32
    %c0_i32_0 = arith.constant 0 : i32
    %c0_i32_1 = arith.constant 0 : i32
    return %c0_i32, %c0_i32_0 : i32, i32
  }
  func.func @transform_1(%arg0: i32) -> (i32, i32) {
    %c0_i32 = arith.constant 0 : i32
    %c0_i32_0 = arith.constant 0 : i32
    %c0_i32_1 = arith.constant 0 : i32
    return %c0_i32, %c0_i32_0 : i32, i32
  }
  func.func @transform_2(%arg0: i32) -> (i32, i32) {
    %c0_i32 = arith.constant 0 : i32
    %c0_i32_0 = arith.constant 0 : i32
    %c0_i32_1 = arith.constant 0 : i32
    return %c0_i32, %c0_i32_0 : i32, i32
  }
  func.func @transform_3(%arg0: i32) -> (i32, i32) {
    %c0_i32 = arith.constant 0 : i32
    %c0_i32_0 = arith.constant 0 : i32
    %c0_i32_1 = arith.constant 0 : i32
    return %c0_i32, %c0_i32_0 : i32, i32
  }
  func.func @transform_4(%arg0: i32) -> (i32, i32) {
    %c0_i32 = arith.constant 0 : i32
    %c0_i32_0 = arith.constant 0 : i32
    %c0_i32_1 = arith.constant 0 : i32
    return %c0_i32, %c0_i32_0 : i32, i32
  }
  func.func @transform_5(%arg0: i32) -> (i32, i32) {
    %c0_i32 = arith.constant 0 : i32
    %c0_i32_0 = arith.constant 0 : i32
    %c0_i32_1 = arith.constant 0 : i32
    return %c0_i32, %c0_i32_0 : i32, i32
  }
  func.func @transform_6(%arg0: i32) -> (i32, i32) {
    %c0_i32 = arith.constant 0 : i32
    %c0_i32_0 = arith.constant 0 : i32
    %c0_i32_1 = arith.constant 0 : i32
    return %c0_i32, %c0_i32_0 : i32, i32
  }
  func.func @transform_7(%arg0: i32) -> (i32, i32) {
    %c0_i32 = arith.constant 0 : i32
    %c0_i32_0 = arith.constant 0 : i32
    %c0_i32_1 = arith.constant 0 : i32
    return %c0_i32, %c0_i32_0 : i32, i32
  }
  func.func @transform_8(%arg0: i32) -> (i32, i32) {
    %c0_i32 = arith.constant 0 : i32
    %c0_i32_0 = arith.constant 0 : i32
    %c0_i32_1 = arith.constant 0 : i32
    return %c0_i32, %c0_i32_0 : i32, i32
  }
}

</mosaic_0001>

<llo_original>
// kernel: block_forward.1
$region0: #{block_forward.1}
  #allocation0 [shape = 'u32[]', space=smem, size = 0x4, offset = 0x4, fixed_abs, tag = 'smem constant byte address 0x4 - core index']
  #allocation1 [shape = 'u32[144,128]{1,0:T(1,128)}', space=vmem, size = 0x12000, scoped, tag = 'internal scratch']
  %s0 = inlined_call_operand.vmem [shape: f32[16,32], index: 0, kind: input, shape index: {}]
  %s1 = inlined_call_operand.vmem [shape: f32[16,128], index: 1, kind: input, shape index: {}]
  %s2 = inlined_call_operand.vmem [shape: f32[64,32], index: 2, kind: input, shape index: {}]
  %s3 = inlined_call_operand.vmem [shape: f32[16,64], index: 3, kind: input, shape index: {}]
  %s4 = inlined_call_operand.vmem [shape: f32[32,160], index: 4, kind: input, shape index: {}]
  %s5 = inlined_call_operand.vmem [shape: f32[32,32], index: 5, kind: input, shape index: {}]
  %s6 = inlined_call_operand.vmem [shape: f32[32,256], index: 6, kind: input, shape index: {}]
  %s7 = inlined_call_operand.vmem [shape: f32[128,32], index: 7, kind: input, shape index: {}]
  %s8 = inlined_call_operand.hbm [shape: f32[16,32], index: 8, kind: output, shape index: {}]
  %s9 = sld [smem:[#allocation0]]
  $region42: #{block_forward.1} parent=0
    _
  %s11 = ssub.s32 1, %s9
  %s12 = scalar_select 0, %s11, %s9
  $region1: #{block_forward.1} parent=0
    #allocation2 [shape = 'u8[8192]{0}', space=vmem, size = 0x2000, scoped, tag = 'output window, operand 0, single buffered']
    #allocation3 [shape = 's32[1]{0}', space=sflag, size = 0x4, scoped, tag = 'scoped memory for block_forward.1']
    %13 = vsyncpa [#allocation3], 0
    // Predicated region
    $region2: #{block_forward.1} parent=1 // pred_check
      _
    $region3: #{block_forward.1} parent=1 // pred_check_branch
      %15 = sbr.rel (0) target = $region5
    $region4: #{block_forward.1} parent=1 // pred_region
      _
    $region5: #{block_forward.1} parent=1 // pred_fallthru
      _
    // Predicated region
    $region6: #{block_forward.1} parent=1 // pred_check
      _
    $region7: #{block_forward.1} parent=1 // pred_check_branch
      %17 = sbr.rel (0) target = $region9
    $region8: #{block_forward.1} parent=1 // pred_region
      _
    $region9: #{block_forward.1} parent=1 // pred_fallthru
      _
    // Predicated region
    $region10: #{block_forward.1} parent=1 // pred_check
      _
    $region11: #{block_forward.1} parent=1 // pred_check_branch
      %19 = sbr.rel (0) target = $region13
    $region12: #{block_forward.1} parent=1 // pred_region
      _
    $region13: #{block_forward.1} parent=1 // pred_fallthru
      _
    // Predicated region
    $region14: #{block_forward.1} parent=1 // pred_check
      _
    $region15: #{block_forward.1} parent=1 // pred_check_branch
      %21 = sbr.rel (0) target = $region17
    $region16: #{block_forward.1} parent=1 // pred_region
      _
    $region17: #{block_forward.1} parent=1 // pred_fallthru
      _
    // Predicated region
    $region18: #{block_forward.1} parent=1 // pred_check
      _
    $region19: #{block_forward.1} parent=1 // pred_check_branch
      %23 = sbr.rel (0) target = $region21
    $region20: #{block_forward.1} parent=1 // pred_region
      _
    $region21: #{block_forward.1} parent=1 // pred_fallthru
      _
    // Predicated region
    $region22: #{block_forward.1} parent=1 // pred_check
      _
    $region23: #{block_forward.1} parent=1 // pred_check_branch
      %25 = sbr.rel (0) target = $region25
    $region24: #{block_forward.1} parent=1 // pred_region
      _
    $region25: #{block_forward.1} parent=1 // pred_fallthru
      _
    // Predicated region
    $region26: #{block_forward.1} parent=1 // pred_check
      _
    $region27: #{block_forward.1} parent=1 // pred_check_branch
      %27 = sbr.rel (0) target = $region29
    $region28: #{block_forward.1} parent=1 // pred_region
      _
    $region29: #{block_forward.1} parent=1 // pred_fallthru
      _
    // Predicated region
    $region30: #{block_forward.1} parent=1 // pred_check
      _
    $region31: #{block_forward.1} parent=1 // pred_check_branch
      %29 = sbr.rel (0) target = $region33
    $region32: #{block_forward.1} parent=1 // pred_region
      _
    $region33: #{block_forward.1} parent=1 // pred_fallthru
      _
    %v30 = vld [vmem:[%s0] sm:$0xff]
    %v31 = vld [vmem:[%s0 + $0x8] sm:$0xff]
    %v32 = vmul.f32 %v30, %v30
    %v33 = vmul.f32 %v31, %v31
    %vm34 = vcmask 261120
    %v35 = vsel %vm34, %v32, 0.0
    %36 = vadd.xlane.f32.xlu0 %v35
    %v37 = vpop.xlane.xlu0 %36
    %v38 = vsel %vm34, %v33, 0.0
    %39 = vadd.xlane.f32.xlu0 %v38
    %v40 = vpop.xlane.xlu0 %39
    %v41 = vrcp.pop 32.0
    %v42 = vmul.f32 %v37, %v41
    %v43 = vmul.f32 %v40, %v41
    %v44 = vadd.f32 %v42, 1e-05
    %v45 = vadd.f32 %v43, 1e-05
    %v46 = vrsqrt.pop %v44
    %v47 = vrsqrt.pop %v45
    %v48 = vmul.f32 %v30, %v46
    %v49 = vmul.f32 %v31, %v47
    %v50 = vld [vmem:[%s4] sm:$0xff]
    %v51 = vld [vmem:[%s4 + $0x8] sm:$0xff]
    %v52 = vld [vmem:[%s4 + $0x10] sm:$0xff]
    %v53 = vld [vmem:[%s4 + $0x18] sm:$0xff]
    %v54 = vld [vmem:[%s4 + $0x20] sm:$0xff]
    %v55 = vld [vmem:[%s4 + $0x28] sm:$0xff]
    %v56 = vld [vmem:[%s4 + $0x30] sm:$0xff]
    %v57 = vld [vmem:[%s4 + $0x38] sm:$0xff]
    %v59 = vsel %vm34, %v48, 0
    %v62 = vsel %vm34, %v49, 0
    %64 = vmatprep.subr.mxu0 0.0
    %65 = vmatpush1.msra.mxu0 0.0
    %66 = vmatprep.subr.mxu0 0.0
    %67 = vmatpush1.msra.mxu0 0.0
    %68 = vmatprep.subr.mxu0 0.0
    %69 = vmatpush1.msra.mxu0 0.0
    %70 = vmatprep.subr.mxu0 0.0
    %71 = vmatpush1.msra.mxu0 0.0
    %72 = vmatprep.subr.mxu0 0.0
    %73 = vmatpush1.msra.mxu0 0.0
    %74 = vmatprep.subr.mxu0 0.0
    %75 = vmatpush1.msra.mxu0 0.0
    %76 = vmatprep.subr.mxu0 0.0
    %77 = vmatpush1.msra.mxu0 0.0
    %78 = vmatprep.subr.mxu0 0.0
    %79 = vmatpush1.msra.mxu0 0.0
    %80 = vmatprep.subr.mxu0 0.0
    %81 = vmatpush1.msra.mxu0 0.0
    %82 = vmatprep.subr.mxu0 0.0
    %83 = vmatpush1.msra.mxu0 0.0
    %84 = vmatprep.subr.mxu0 0.0
    %85 = vmatpush1.msra.mxu0 0.0
    %86 = vmatprep.subr.mxu0 0.0
    %87 = vmatpush1.msra.mxu0 0.0
    %88 = vmatprep.subr.mxu0 %v57
    %89 = vmatpush1.msra.mxu0 %v56
    %90 = vmatprep.subr.mxu0 %v55
    %91 = vmatpush1.msra.mxu0 %v54
    %92 = vmatprep.subr.mxu0 %v53
    %93 = vmatpush1.msra.mxu0 %v52
    %94 = vmatprep.subr.mxu0 %v51
    %95 = vmatpush1.msra.mxu0 %v50
    %96 = vmatprep.subr.mxu0 0.0
    %97 = vmatpush2.msra.mxu0 0.0
    %98 = vmatprep.subr.mxu0 0.0
    %99 = vmatpush2.msra.mxu0 0.0
    %100 = vmatprep.subr.mxu0 0.0
    %101 = vmatpush2.msra.mxu0 0.0
    %102 = vmatprep.subr.mxu0 0.0
    %103 = vmatpush2.msra.mxu0 0.0
    %104 = vmatprep.subr.mxu0 0.0
    %105 = vmatpush2.msra.mxu0 0.0
    %106 = vmatprep.subr.mxu0 0.0
    %107 = vmatpush2.msra.mxu0 0.0
    %108 = vmatprep.subr.mxu0 0.0
    %109 = vmatpush2.msra.mxu0 0.0
    %110 = vmatprep.subr.mxu0 0.0
    %111 = vmatpush2.msra.mxu0 0.0
    %112 = vmatprep.subr.mxu0 0.0
    %113 = vmatpush2.msra.mxu0 0.0
    %114 = vmatprep.subr.mxu0 0.0
    %115 = vmatpush2.msra.mxu0 0.0
    %116 = vmatprep.subr.mxu0 0.0
    %117 = vmatpush2.msra.mxu0 0.0
    %118 = vmatprep.subr.mxu0 0.0
    %119 = vmatpush2.msra.mxu0 0.0
    %120 = vmatprep.subr.mxu0 0.0
    %121 = vmatpush2.msra.mxu0 0.0
    %122 = vmatprep.subr.mxu0 0.0
    %123 = vmatpush2.msra.mxu0 0.0
    %124 = vmatprep.subr.mxu0 0.0
    %125 = vmatpush2.msra.mxu0 0.0
    %126 = vmatprep.subr.mxu0 0.0
    %127 = vmatpush2.msra.mxu0 0.0
    %128 = vmatprep.mubr.f32.mxu0 0.0
    %129 = vmatmul.mubr.f32.gmra.mxu0 %v59
    %v130 = vpop.f32.mrf.mxu0
    %v131 = vadd.f32 0.0, %v130
    %v132 = vpop.f32.mrf.mxu0
    %v133 = vadd.f32 0.0, %v132
    %134 = vmatprep.mubr.f32.mxu0 0.0
    %135 = vmatmul.mubr.f32.gmra.mxu0 %v62
    %v136 = vpop.f32.mrf.mxu0
    %v137 = vadd.f32 0.0, %v136
    %v138 = vpop.f32.mrf.mxu0
    %v139 = vadd.f32 0.0, %v138
    %140 = vdwg.mxu0
    %v141 = vld [vmem:[%s1] sm:$0xff]
    %v142 = vld [vmem:[%s1 + $0x8] sm:$0xff]
    %v143 = vmul.f32 %v131, %v141
    %v144 = vmul.f32 %v137, %v142
    %147 = vrot.lane.b32.xlu0 %v143, 64
    %v148 = vpop.permute.xlu0 %147
    %149 = vrot.lane.b32.xlu0 %v144, 64
    %v150 = vpop.permute.xlu0 %149
    %v153 = vadd.f32 %v143, %v148
    %v154 = vadd.f32 %v144, %v150
    %v155 = vld [vmem:[%s2] sm:$0xff]
    %v156 = vld [vmem:[%s2 + $0x8] sm:$0xff]
    %v157 = vld [vmem:[%s2 + $0x10] sm:$0xff]
    %v158 = vld [vmem:[%s2 + $0x18] sm:$0xff]
    %v159 = vld [vmem:[%s2 + $0x20] sm:$0xff]
    %v160 = vld [vmem:[%s2 + $0x28] sm:$0xff]
    %v161 = vld [vmem:[%s2 + $0x30] sm:$0xff]
    %v162 = vld [vmem:[%s2 + $0x38] sm:$0xff]
    %165 = vrot.lane.b32.xlu0 %v153, 96
    %v166 = vpop.permute.xlu0 %165
    %167 = vrot.lane.b32.xlu0 %v154, 96
    %v168 = vpop.permute.xlu0 %167
    %v171 = vmul.f32 %v155, %v166
    %v172 = vmul.f32 %v156, %v168
    %v173 = vmul.f32 %v157, %v166
    %v174 = vmul.f32 %v158, %v168
    %v175 = vmul.f32 %v159, %v166
    %v176 = vmul.f32 %v160, %v168
    %v177 = vmul.f32 %v161, %v166
    %v178 = vmul.f32 %v162, %v168
    %v179 = vmul.f32 %v155, %v133
    %v180 = vmul.f32 %v156, %v139
    %v181 = vmul.f32 %v157, %v133
    %v182 = vmul.f32 %v158, %v139
    %v183 = vmul.f32 %v159, %v133
    %v184 = vmul.f32 %v160, %v139
    %v185 = vmul.f32 %v161, %v133
    %v186 = vmul.f32 %v162, %v139
    %v187 = vld [vmem:[%s3] sm:$0xff]
    %v188 = vld [vmem:[%s3 + $0x8] sm:$0xff]
    %v189 = vsel %vm34, %v153, 0
    %v191 = vsel %vm34, %v154, 0
    %v194 = vsel %vm34, %v171, 0
    %v197 = vsel %vm34, %v172, 0
    %v200 = vsel %vm34, %v173, 0
    %v203 = vsel %vm34, %v174, 0
    %v206 = vsel %vm34, %v175, 0
    %v209 = vsel %vm34, %v176, 0
    %v212 = vsel %vm34, %v177, 0
    %v215 = vsel %vm34, %v178, 0
    %217 = vmatprep.subr.mxu0 0.0
    %218 = vmatpush1.xpose.msra.mxu0 0.0
    %219 = vmatprep.subr.mxu0 0.0
    %220 = vmatpush1.xpose.msra.mxu0 0.0
    %221 = vmatprep.subr.mxu0 0.0
    %222 = vmatpush1.xpose.msra.mxu0 0.0
    %223 = vmatprep.subr.mxu0 0.0
    %224 = vmatpush1.xpose.msra.mxu0 0.0
    %225 = vmatprep.subr.mxu0 0.0
    %226 = vmatpush1.xpose.msra.mxu0 0.0
    %227 = vmatprep.subr.mxu0 0.0
    %228 = vmatpush1.xpose.msra.mxu0 0.0
    %229 = vmatprep.subr.mxu0 0.0
    %230 = vmatpush1.xpose.msra.mxu0 0.0
    %231 = vmatprep.subr.mxu0 0.0
    %232 = vmatpush1.xpose.msra.mxu0 0.0
    %233 = vmatprep.subr.mxu0 0.0
    %234 = vmatpush1.xpose.msra.mxu0 %v215
    %235 = vmatprep.subr.mxu0 0.0
    %236 = vmatpush1.xpose.msra.mxu0 %v212
    %237 = vmatprep.subr.mxu0 0.0
    %238 = vmatpush1.xpose.msra.mxu0 %v209
    %239 = vmatprep.subr.mxu0 0.0
    %240 = vmatpush1.xpose.msra.mxu0 %v206
    %241 = vmatprep.subr.mxu0 0.0
    %242 = vmatpush1.xpose.msra.mxu0 %v203
    %243 = vmatprep.subr.mxu0 0.0
    %244 = vmatpush1.xpose.msra.mxu0 %v200
    %245 = vmatprep.subr.mxu0 0.0
    %246 = vmatpush1.xpose.msra.mxu0 %v197
    %247 = vmatprep.subr.mxu0 0.0
    %248 = vmatpush1.xpose.msra.mxu0 %v194
    %249 = vmatprep.subr.mxu0 0.0
    %250 = vmatpush2.xpose.msra.mxu0 0.0
    %251 = vmatprep.subr.mxu0 0.0
    %252 = vmatpush2.xpose.msra.mxu0 0.0
    %253 = vmatprep.subr.mxu0 0.0
    %254 = vmatpush2.xpose.msra.mxu0 0.0
    %255 = vmatprep.subr.mxu0 0.0
    %256 = vmatpush2.xpose.msra.mxu0 0.0
    %257 = vmatprep.subr.mxu0 0.0
    %258 = vmatpush2.xpose.msra.mxu0 0.0
    %259 = vmatprep.subr.mxu0 0.0
    %260 = vmatpush2.xpose.msra.mxu0 0.0
    %261 = vmatprep.subr.mxu0 0.0
    %262 = vmatpush2.xpose.msra.mxu0 0.0
    %263 = vmatprep.subr.mxu0 0.0
    %264 = vmatpush2.xpose.msra.mxu0 0.0
    %265 = vmatprep.subr.mxu0 0.0
    %266 = vmatpush2.xpose.msra.mxu0 0.0
    %267 = vmatprep.subr.mxu0 0.0
    %268 = vmatpush2.xpose.msra.mxu0 0.0
    %269 = vmatprep.subr.mxu0 0.0
    %270 = vmatpush2.xpose.msra.mxu0 0.0
    %271 = vmatprep.subr.mxu0 0.0
    %272 = vmatpush2.xpose.msra.mxu0 0.0
    %273 = vmatprep.subr.mxu0 0.0
    %274 = vmatpush2.xpose.msra.mxu0 0.0
    %275 = vmatprep.subr.mxu0 0.0
    %276 = vmatpush2.xpose.msra.mxu0 0.0
    %277 = vmatprep.subr.mxu0 0.0
    %278 = vmatpush2.xpose.msra.mxu0 0.0
    %279 = vmatprep.subr.mxu0 0.0
    %280 = vmatpush2.xpose.msra.mxu0 0.0
    %281 = vmatprep.mubr.f32.mxu0 0.0
    %282 = vmatmul.mubr.f32.gmra.mxu0 %v189
    %v283 = vpop.f32.mrf.mxu0
    %v284 = vadd.f32 %v187, %v283
    %v285 = vpop.f32.mrf.mxu0
    %286 = vmatprep.mubr.f32.mxu0 0.0
    %287 = vmatmul.mubr.f32.gmra.mxu0 %v191
    %v288 = vpop.f32.mrf.mxu0
    %v289 = vadd.f32 %v188, %v288
    %v290 = vpop.f32.mrf.mxu0
    %291 = vdwg.mxu0
    %vm292 = vcmask 523264
    %v293 = vsel %vm292, %v284, -inf
    %294 = vmax.xlane.f32.xlu0 %v293
    %v295 = vpop.xlane.xlu0 %294
    %v296 = vsel %vm292, %v289, -inf
    %297 = vmax.xlane.f32.xlu0 %v296
    %v298 = vpop.xlane.xlu0 %297
    %v299 = vsub.f32 %v284, %v295
    %v300 = vsub.f32 %v289, %v298
    %v301 = vmul.f32 %v299, 1.442695
    %v302 = vpow.pop %v301
    %v303 = vmul.f32 %v300, 1.442695
    %v304 = vpow.pop %v303
    %v306 = vsel %vm292, %v302, 0
    %v309 = vsel %vm292, %v304, 0
    %311 = vmatprep.subr.mxu0 0.0
    %312 = vmatpush1.msra.mxu0 0.0
    %313 = vmatprep.subr.mxu0 0.0
    %314 = vmatpush1.msra.mxu0 0.0
    %315 = vmatprep.subr.mxu0 0.0
    %316 = vmatpush1.msra.mxu0 0.0
    %317 = vmatprep.subr.mxu0 0.0
    %318 = vmatpush1.msra.mxu0 0.0
    %319 = vmatprep.subr.mxu0 0.0
    %320 = vmatpush1.msra.mxu0 0.0
    %321 = vmatprep.subr.mxu0 0.0
    %322 = vmatpush1.msra.mxu0 0.0
    %323 = vmatprep.subr.mxu0 0.0
    %324 = vmatpush1.msra.mxu0 0.0
    %325 = vmatprep.subr.mxu0 0.0
    %326 = vmatpush1.msra.mxu0 0.0
    %327 = vmatprep.subr.mxu0 0.0
    %328 = vmatpush1.msra.mxu0 %v186
    %329 = vmatprep.subr.mxu0 0.0
    %330 = vmatpush1.msra.mxu0 %v185
    %331 = vmatprep.subr.mxu0 0.0
    %332 = vmatpush1.msra.mxu0 %v184
    %333 = vmatprep.subr.mxu0 0.0
    %334 = vmatpush1.msra.mxu0 %v183
    %335 = vmatprep.subr.mxu0 0.0
    %336 = vmatpush1.msra.mxu0 %v182
    %337 = vmatprep.subr.mxu0 0.0
    %338 = vmatpush1.msra.mxu0 %v181
    %339 = vmatprep.subr.mxu0 0.0
    %340 = vmatpush1.msra.mxu0 %v180
    %341 = vmatprep.subr.mxu0 0.0
    %342 = vmatpush1.msra.mxu0 %v179
    %343 = vmatprep.subr.mxu0 0.0
    %344 = vmatpush2.msra.mxu0 0.0
    %345 = vmatprep.subr.mxu0 0.0
    %346 = vmatpush2.msra.mxu0 0.0
    %347 = vmatprep.subr.mxu0 0.0
    %348 = vmatpush2.msra.mxu0 0.0
    %349 = vmatprep.subr.mxu0 0.0
    %350 = vmatpush2.msra.mxu0 0.0
    %351 = vmatprep.subr.mxu0 0.0
    %352 = vmatpush2.msra.mxu0 0.0
    %353 = vmatprep.subr.mxu0 0.0
    %354 = vmatpush2.msra.mxu0 0.0
    %355 = vmatprep.subr.mxu0 0.0
    %356 = vmatpush2.msra.mxu0 0.0
    %357 = vmatprep.subr.mxu0 0.0
    %358 = vmatpush2.msra.mxu0 0.0
    %359 = vmatprep.subr.mxu0 0.0
    %360 = vmatpush2.msra.mxu0 0.0
    %361 = vmatprep.subr.mxu0 0.0
    %362 = vmatpush2.msra.mxu0 0.0
    %363 = vmatprep.subr.mxu0 0.0
    %364 = vmatpush2.msra.mxu0 0.0
    %365 = vmatprep.subr.mxu0 0.0
    %366 = vmatpush2.msra.mxu0 0.0
    %367 = vmatprep.subr.mxu0 0.0
    %368 = vmatpush2.msra.mxu0 0.0
    %369 = vmatprep.subr.mxu0 0.0
    %370 = vmatpush2.msra.mxu0 0.0
    %371 = vmatprep.subr.mxu0 0.0
    %372 = vmatpush2.msra.mxu0 0.0
    %373 = vmatprep.subr.mxu0 0.0
    %374 = vmatpush2.msra.mxu0 0.0
    %375 = vmatprep.mubr.f32.mxu0 0.0
    %376 = vmatmul.mubr.f32.gmra.mxu0 %v306
    %v377 = vpop.f32.mrf.mxu0
    %v378 = vadd.f32 0.0, %v377
    %v379 = vpop.f32.mrf.mxu0
    %380 = vmatprep.mubr.f32.mxu0 0.0
    %381 = vmatmul.mubr.f32.gmra.mxu0 %v309
    %v382 = vpop.f32.mrf.mxu0
    %v383 = vadd.f32 0.0, %v382
    %v384 = vpop.f32.mrf.mxu0
    %385 = vdwg.mxu0
    %386 = vmatprep.subr.mxu0 0.0
    %387 = vmatpush1.msra.mxu0 0.0
    %388 = vmatprep.subr.mxu0 0.0
    %389 = vmatpush1.msra.mxu0 0.0
    %390 = vmatprep.subr.mxu0 0.0
    %391 = vmatpush1.msra.mxu0 0.0
    %392 = vmatprep.subr.mxu0 0.0
    %393 = vmatpush1.msra.mxu0 0.0
    %394 = vmatprep.subr.mxu0 0.0
    %395 = vmatpush1.msra.mxu0 0.0
    %396 = vmatprep.subr.mxu0 0.0
    %397 = vmatpush1.msra.mxu0 0.0
    %398 = vmatprep.subr.mxu0 0.0
    %399 = vmatpush1.msra.mxu0 0.0
    %400 = vmatprep.subr.mxu0 0.0
    %401 = vmatpush1.msra.mxu0 0.0
    %402 = vmatprep.subr.mxu0 0.0
    %403 = vmatpush1.msra.mxu0 %v162
    %404 = vmatprep.subr.mxu0 0.0
    %405 = vmatpush1.msra.mxu0 %v161
    %406 = vmatprep.subr.mxu0 0.0
    %407 = vmatpush1.msra.mxu0 %v160
    %408 = vmatprep.subr.mxu0 0.0
    %409 = vmatpush1.msra.mxu0 %v159
    %410 = vmatprep.subr.mxu0 0.0
    %411 = vmatpush1.msra.mxu0 %v158
    %412 = vmatprep.subr.mxu0 0.0
    %413 = vmatpush1.msra.mxu0 %v157
    %414 = vmatprep.subr.mxu0 0.0
    %415 = vmatpush1.msra.mxu0 %v156
    %416 = vmatprep.subr.mxu0 0.0
    %417 = vmatpush1.msra.mxu0 %v155
    %418 = vmatprep.subr.mxu0 0.0
    %419 = vmatpush2.msra.mxu0 0.0
    %420 = vmatprep.subr.mxu0 0.0
    %421 = vmatpush2.msra.mxu0 0.0
    %422 = vmatprep.subr.mxu0 0.0
    %423 = vmatpush2.msra.mxu0 0.0
    %424 = vmatprep.subr.mxu0 0.0
    %425 = vmatpush2.msra.mxu0 0.0
    %426 = vmatprep.subr.mxu0 0.0
    %427 = vmatpush2.msra.mxu0 0.0
    %428 = vmatprep.subr.mxu0 0.0
    %429 = vmatpush2.msra.mxu0 0.0
    %430 = vmatprep.subr.mxu0 0.0
    %431 = vmatpush2.msra.mxu0 0.0
    %432 = vmatprep.subr.mxu0 0.0
    %433 = vmatpush2.msra.mxu0 0.0
    %434 = vmatprep.subr.mxu0 0.0
    %435 = vmatpush2.msra.mxu0 0.0
    %436 = vmatprep.subr.mxu0 0.0
    %437 = vmatpush2.msra.mxu0 0.0
    %438 = vmatprep.subr.mxu0 0.0
    %439 = vmatpush2.msra.mxu0 0.0
    %440 = vmatprep.subr.mxu0 0.0
    %441 = vmatpush2.msra.mxu0 0.0
    %442 = vmatprep.subr.mxu0 0.0
    %443 = vmatpush2.msra.mxu0 0.0
    %444 = vmatprep.subr.mxu0 0.0
    %445 = vmatpush2.msra.mxu0 0.0
    %446 = vmatprep.subr.mxu0 0.0
    %447 = vmatpush2.msra.mxu0 0.0
    %448 = vmatprep.subr.mxu0 0.0
    %449 = vmatpush2.msra.mxu0 0.0
    %450 = vmatprep.mubr.f32.mxu0 0.0
    %451 = vmatmul.mubr.f32.gmra.mxu0 %v306
    %v452 = vpop.f32.mrf.mxu0
    %v453 = vadd.f32 0.0, %v452
    %v454 = vpop.f32.mrf.mxu0
    %455 = vmatprep.mubr.f32.mxu0 0.0
    %456 = vmatmul.mubr.f32.gmra.mxu0 %v309
    %v457 = vpop.f32.mrf.mxu0
    %v458 = vadd.f32 0.0, %v457
    %v459 = vpop.f32.mrf.mxu0
    %460 = vdwg.mxu0
    %v461 = vmax.f32 %v453, 1e-30
    %v462 = vmax.f32 %v458, 1e-30
    %v463 = vrcp.pop %v461
    %v464 = vrcp.pop %v462
    %v465 = vmul.f32 %v378, %v463
    %v466 = vmul.f32 %v383, %v464
    %v467 = vld [vmem:[%s5] sm:$0xff]
    %v468 = vld [vmem:[%s5 + $0x8] sm:$0xff]
    %v469 = vld [vmem:[%s5 + $0x10] sm:$0xff]
    %v470 = vld [vmem:[%s5 + $0x18] sm:$0xff]
    %v472 = vsel %vm34, %v465, 0
    %v475 = vsel %vm34, %v466, 0
    %477 = vmatprep.subr.mxu0 0.0
    %478 = vmatpush1.msra.mxu0 0.0
    %479 = vmatprep.subr.mxu0 0.0
    %480 = vmatpush1.msra.mxu0 0.0
    %481 = vmatprep.subr.mxu0 0.0
    %482 = vmatpush1.msra.mxu0 0.0
    %483 = vmatprep.subr.mxu0 0.0
    %484 = vmatpush1.msra.mxu0 0.0
    %485 = vmatprep.subr.mxu0 0.0
    %486 = vmatpush1.msra.mxu0 0.0
    %487 = vmatprep.subr.mxu0 0.0
    %488 = vmatpush1.msra.mxu0 0.0
    %489 = vmatprep.subr.mxu0 0.0
    %490 = vmatpush1.msra.mxu0 0.0
    %491 = vmatprep.subr.mxu0 0.0
    %492 = vmatpush1.msra.mxu0 0.0
    %493 = vmatprep.subr.mxu0 0.0
    %494 = vmatpush1.msra.mxu0 0.0
    %495 = vmatprep.subr.mxu0 0.0
    %496 = vmatpush1.msra.mxu0 0.0
    %497 = vmatprep.subr.mxu0 0.0
    %498 = vmatpush1.msra.mxu0 0.0
    %499 = vmatprep.subr.mxu0 0.0
    %500 = vmatpush1.msra.mxu0 0.0
    %501 = vmatprep.subr.mxu0 0.0
    %502 = vmatpush1.msra.mxu0 %v470
    %503 = vmatprep.subr.mxu0 0.0
    %504 = vmatpush1.msra.mxu0 %v469
    %505 = vmatprep.subr.mxu0 0.0
    %506 = vmatpush1.msra.mxu0 %v468
    %507 = vmatprep.subr.mxu0 0.0
    %508 = vmatpush1.msra.mxu0 %v467
    %509 = vmatprep.subr.mxu0 0.0
    %510 = vmatpush2.msra.mxu0 0.0
    %511 = vmatprep.subr.mxu0 0.0
    %512 = vmatpush2.msra.mxu0 0.0
    %513 = vmatprep.subr.mxu0 0.0
    %514 = vmatpush2.msra.mxu0 0.0
    %515 = vmatprep.subr.mxu0 0.0
    %516 = vmatpush2.msra.mxu0 0.0
    %517 = vmatprep.subr.mxu0 0.0
    %518 = vmatpush2.msra.mxu0 0.0
    %519 = vmatprep.subr.mxu0 0.0
    %520 = vmatpush2.msra.mxu0 0.0
    %521 = vmatprep.subr.mxu0 0.0
    %522 = vmatpush2.msra.mxu0 0.0
    %523 = vmatprep.subr.mxu0 0.0
    %524 = vmatpush2.msra.mxu0 0.0
    %525 = vmatprep.subr.mxu0 0.0
    %526 = vmatpush2.msra.mxu0 0.0
    %527 = vmatprep.subr.mxu0 0.0
    %528 = vmatpush2.msra.mxu0 0.0
    %529 = vmatprep.subr.mxu0 0.0
    %530 = vmatpush2.msra.mxu0 0.0
    %531 = vmatprep.subr.mxu0 0.0
    %532 = vmatpush2.msra.mxu0 0.0
    %533 = vmatprep.subr.mxu0 0.0
    %534 = vmatpush2.msra.mxu0 0.0
    %535 = vmatprep.subr.mxu0 0.0
    %536 = vmatpush2.msra.mxu0 0.0
    %537 = vmatprep.subr.mxu0 0.0
    %538 = vmatpush2.msra.mxu0 0.0
    %539 = vmatprep.subr.mxu0 0.0
    %540 = vmatpush2.msra.mxu0 0.0
    %541 = vmatprep.mubr.f32.mxu0 0.0
    %542 = vmatmul.mubr.f32.gmra.mxu0 %v472
    %v543 = vpop.f32.mrf.mxu0
    %v544 = vadd.f32 0.0, %v543
    %v545 = vpop.f32.mrf.mxu0
    %546 = vmatprep.mubr.f32.mxu0 0.0
    %547 = vmatmul.mubr.f32.gmra.mxu0 %v475
    %v548 = vpop.f32.mrf.mxu0
    %v549 = vadd.f32 0.0, %v548
    %v550 = vpop.f32.mrf.mxu0
    %551 = vdwg.mxu0
    %v552 = vadd.f32 %v30, %v544
    %v553 = vadd.f32 %v31, %v549
    %v554 = vmul.f32 %v552, %v552
    %v555 = vmul.f32 %v553, %v553
    %v556 = vsel %vm34, %v554, 0.0
    %557 = vadd.xlane.f32.xlu0 %v556
    %v558 = vpop.xlane.xlu0 %557
    %v559 = vsel %vm34, %v555, 0.0
    %560 = vadd.xlane.f32.xlu0 %v559
    %v561 = vpop.xlane.xlu0 %560
    %v562 = vmul.f32 %v558, %v41
    %v563 = vmul.f32 %v561, %v41
    %v564 = vadd.f32 %v562, 1e-05
    %v565 = vadd.f32 %v563, 1e-05
    %v566 = vrsqrt.pop %v564
    %v567 = vrsqrt.pop %v565
    %v568 = vmul.f32 %v552, %v566
    %v569 = vmul.f32 %v553, %v567
    %v570 = vld [vmem:[%s6] sm:$0xff]
    %v571 = vld [vmem:[%s6 + $0x8] sm:$0xff]
    %v572 = vld [vmem:[%s6 + $0x10] sm:$0xff]
    %v573 = vld [vmem:[%s6 + $0x18] sm:$0xff]
    %v574 = vld [vmem:[%s6 + $0x20] sm:$0xff]
    %v575 = vld [vmem:[%s6 + $0x28] sm:$0xff]
    %v576 = vld [vmem:[%s6 + $0x30] sm:$0xff]
    %v577 = vld [vmem:[%s6 + $0x38] sm:$0xff]
    %v579 = vsel %vm34, %v568, 0
    %v582 = vsel %vm34, %v569, 0
    %584 = vmatprep.subr.mxu0 0.0
    %585 = vmatpush1.msra.mxu0 0.0
    %586 = vmatprep.subr.mxu0 0.0
    %587 = vmatpush1.msra.mxu0 0.0
    %588 = vmatprep.subr.mxu0 0.0
    %589 = vmatpush1.msra.mxu0 0.0
    %590 = vmatprep.subr.mxu0 0.0
    %591 = vmatpush1.msra.mxu0 0.0
    %592 = vmatprep.subr.mxu0 0.0
    %593 = vmatpush1.msra.mxu0 0.0
    %594 = vmatprep.subr.mxu0 0.0
    %595 = vmatpush1.msra.mxu0 0.0
    %596 = vmatprep.subr.mxu0 0.0
    %597 = vmatpush1.msra.mxu0 0.0
    %598 = vmatprep.subr.mxu0 0.0
    %599 = vmatpush1.msra.mxu0 0.0
    %600 = vmatprep.subr.mxu0 0.0
    %601 = vmatpush1.msra.mxu0 0.0
    %602 = vmatprep.subr.mxu0 0.0
    %603 = vmatpush1.msra.mxu0 0.0
    %604 = vmatprep.subr.mxu0 0.0
    %605 = vmatpush1.msra.mxu0 0.0
    %606 = vmatprep.subr.mxu0 0.0
    %607 = vmatpush1.msra.mxu0 0.0
    %608 = vmatprep.subr.mxu0 %v577
    %609 = vmatpush1.msra.mxu0 %v576
    %610 = vmatprep.subr.mxu0 %v575
    %611 = vmatpush1.msra.mxu0 %v574
    %612 = vmatprep.subr.mxu0 %v573
    %613 = vmatpush1.msra.mxu0 %v572
    %614 = vmatprep.subr.mxu0 %v571
    %615 = vmatpush1.msra.mxu0 %v570
    %616 = vmatprep.subr.mxu0 0.0
    %617 = vmatpush2.msra.mxu0 0.0
    %618 = vmatprep.subr.mxu0 0.0
    %619 = vmatpush2.msra.mxu0 0.0
    %620 = vmatprep.subr.mxu0 0.0
    %621 = vmatpush2.msra.mxu0 0.0
    %622 = vmatprep.subr.mxu0 0.0
    %623 = vmatpush2.msra.mxu0 0.0
    %624 = vmatprep.subr.mxu0 0.0
    %625 = vmatpush2.msra.mxu0 0.0
    %626 = vmatprep.subr.mxu0 0.0
    %627 = vmatpush2.msra.mxu0 0.0
    %628 = vmatprep.subr.mxu0 0.0
    %629 = vmatpush2.msra.mxu0 0.0
    %630 = vmatprep.subr.mxu0 0.0
    %631 = vmatpush2.msra.mxu0 0.0
    %632 = vmatprep.subr.mxu0 0.0
    %633 = vmatpush2.msra.mxu0 0.0
    %634 = vmatprep.subr.mxu0 0.0
    %635 = vmatpush2.msra.mxu0 0.0
    %636 = vmatprep.subr.mxu0 0.0
    %637 = vmatpush2.msra.mxu0 0.0
    %638 = vmatprep.subr.mxu0 0.0
    %639 = vmatpush2.msra.mxu0 0.0
    %640 = vmatprep.subr.mxu0 0.0
    %641 = vmatpush2.msra.mxu0 0.0
    %642 = vmatprep.subr.mxu0 0.0
    %643 = vmatpush2.msra.mxu0 0.0
    %644 = vmatprep.subr.mxu0 0.0
    %645 = vmatpush2.msra.mxu0 0.0
    %646 = vmatprep.subr.mxu0 0.0
    %647 = vmatpush2.msra.mxu0 0.0
    %648 = vmatprep.mubr.f32.mxu0 0.0
    %649 = vmatmul.mubr.f32.gmra.mxu0 %v579
    %v650 = vpop.f32.mrf.mxu0
    %v651 = vadd.f32 0.0, %v650
    %v652 = vpop.f32.mrf.mxu0
    %v653 = vadd.f32 0.0, %v652
    %654 = vmatprep.mubr.f32.mxu0 0.0
    %655 = vmatmul.mubr.f32.gmra.mxu0 %v582
    %v656 = vpop.f32.mrf.mxu0
    %v657 = vadd.f32 0.0, %v656
    %v658 = vpop.f32.mrf.mxu0
    %v659 = vadd.f32 0.0, %v658
    %660 = vdwg.mxu0
    %v661 = vxor.u32 %v651, 2147483648
    %v662 = vxor.u32 %v657, 2147483648
    %v663 = vmul.f32 %v661, 1.442695
    %v664 = vpow.pop %v663
    %v665 = vmul.f32 %v662, 1.442695
    %v666 = vpow.pop %v665
    %v667 = vadd.f32 %v664, 1.0
    %v668 = vadd.f32 %v666, 1.0
    %v669 = vrcp.pop %v667
    %v670 = vmul.f32 1.0, %v669
    %v671 = vrcp.pop %v668
    %v672 = vmul.f32 1.0, %v671
    %v673 = vmul.f32 %v651, %v670
    %v674 = vmul.f32 %v657, %v672
    %v675 = vmul.f32 %v673, %v653
    %v676 = vmul.f32 %v674, %v659
    %v677 = vld [vmem:[%s7] sm:$0xff]
    %v678 = vld [vmem:[%s7 + $0x8] sm:$0xff]
    %v679 = vld [vmem:[%s7 + $0x10] sm:$0xff]
    %v680 = vld [vmem:[%s7 + $0x18] sm:$0xff]
    %v681 = vld [vmem:[%s7 + $0x20] sm:$0xff]
    %v682 = vld [vmem:[%s7 + $0x28] sm:$0xff]
    %v683 = vld [vmem:[%s7 + $0x30] sm:$0xff]
    %v684 = vld [vmem:[%s7 + $0x38] sm:$0xff]
    %v685 = vld [vmem:[%s7 + $0x40] sm:$0xff]
    %v686 = vld [vmem:[%s7 + $0x48] sm:$0xff]
    %v687 = vld [vmem:[%s7 + $0x50] sm:$0xff]
    %v688 = vld [vmem:[%s7 + $0x58] sm:$0xff]
    %v689 = vld [vmem:[%s7 + $0x60] sm:$0xff]
    %v690 = vld [vmem:[%s7 + $0x68] sm:$0xff]
    %v691 = vld [vmem:[%s7 + $0x70] sm:$0xff]
    %v692 = vld [vmem:[%s7 + $0x78] sm:$0xff]
    %693 = vmatprep.subr.mxu0 0.0
    %694 = vmatpush1.msra.mxu0 %v692
    %695 = vmatprep.subr.mxu0 0.0
    %696 = vmatpush1.msra.mxu0 %v691
    %697 = vmatprep.subr.mxu0 0.0
    %698 = vmatpush1.msra.mxu0 %v690
    %699 = vmatprep.subr.mxu0 0.0
    %700 = vmatpush1.msra.mxu0 %v689
    %701 = vmatprep.subr.mxu0 0.0
    %702 = vmatpush1.msra.mxu0 %v688
    %703 = vmatprep.subr.mxu0 0.0
    %704 = vmatpush1.msra.mxu0 %v687
    %705 = vmatprep.subr.mxu0 0.0
    %706 = vmatpush1.msra.mxu0 %v686
    %707 = vmatprep.subr.mxu0 0.0
    %708 = vmatpush1.msra.mxu0 %v685
    %709 = vmatprep.subr.mxu0 0.0
    %710 = vmatpush1.msra.mxu0 %v684
    %711 = vmatprep.subr.mxu0 0.0
    %712 = vmatpush1.msra.mxu0 %v683
    %713 = vmatprep.subr.mxu0 0.0
    %714 = vmatpush1.msra.mxu0 %v682
    %715 = vmatprep.subr.mxu0 0.0
    %716 = vmatpush1.msra.mxu0 %v681
    %717 = vmatprep.subr.mxu0 0.0
    %718 = vmatpush1.msra.mxu0 %v680
    %719 = vmatprep.subr.mxu0 0.0
    %720 = vmatpush1.msra.mxu0 %v679
    %721 = vmatprep.subr.mxu0 0.0
    %722 = vmatpush1.msra.mxu0 %v678
    %723 = vmatprep.subr.mxu0 0.0
    %724 = vmatpush1.msra.mxu0 %v677
    %725 = vmatprep.subr.mxu0 0.0
    %726 = vmatpush2.msra.mxu0 0.0
    %727 = vmatprep.subr.mxu0 0.0
    %728 = vmatpush2.msra.mxu0 0.0
    %729 = vmatprep.subr.mxu0 0.0
    %730 = vmatpush2.msra.mxu0 0.0
    %731 = vmatprep.subr.mxu0 0.0
    %732 = vmatpush2.msra.mxu0 0.0
    %733 = vmatprep.subr.mxu0 0.0
    %734 = vmatpush2.msra.mxu0 0.0
    %735 = vmatprep.subr.mxu0 0.0
    %736 = vmatpush2.msra.mxu0 0.0
    %737 = vmatprep.subr.mxu0 0.0
    %738 = vmatpush2.msra.mxu0 0.0
    %739 = vmatprep.subr.mxu0 0.0
    %740 = vmatpush2.msra.mxu0 0.0
    %741 = vmatprep.subr.mxu0 0.0
    %742 = vmatpush2.msra.mxu0 0.0
    %743 = vmatprep.subr.mxu0 0.0
    %744 = vmatpush2.msra.mxu0 0.0
    %745 = vmatprep.subr.mxu0 0.0
    %746 = vmatpush2.msra.mxu0 0.0
    %747 = vmatprep.subr.mxu0 0.0
    %748 = vmatpush2.msra.mxu0 0.0
    %749 = vmatprep.subr.mxu0 0.0
    %750 = vmatpush2.msra.mxu0 0.0
    %751 = vmatprep.subr.mxu0 0.0
    %752 = vmatpush2.msra.mxu0 0.0
    %753 = vmatprep.subr.mxu0 0.0
    %754 = vmatpush2.msra.mxu0 0.0
    %755 = vmatprep.subr.mxu0 0.0
    %756 = vmatpush2.msra.mxu0 0.0
    %757 = vmatprep.mubr.f32.mxu0 0.0
    %758 = vmatmul.mubr.f32.gmra.mxu0 %v675
    %v759 = vpop.f32.mrf.mxu0
    %v760 = vadd.f32 0.0, %v759
    %v761 = vpop.f32.mrf.mxu0
    %762 = vmatprep.mubr.f32.mxu0 0.0
    %763 = vmatmul.mubr.f32.gmra.mxu0 %v676
    %v764 = vpop.f32.mrf.mxu0
    %v765 = vadd.f32 0.0, %v764
    %v766 = vpop.f32.mrf.mxu0
    %767 = vdwg.mxu0
    %v768 = vadd.f32 %v552, %v760
    %v769 = vadd.f32 %v553, %v765
    %770 = vst.msk [vmem:[#allocation2] sm:$0xff] %vm34, %v768
    %771 = vst.msk [vmem:[#allocation2 + $0x8] sm:$0xff] %vm34, %v769
    // Predicated region
    $region34: #{block_forward.1} parent=1 // pred_check
      _
    $region35: #{block_forward.1} parent=1 // pred_check_branch
      %773 = sbr.rel (0) target = $region37
    $region36: #{block_forward.1} parent=1 // pred_region
      %s775 = ssub.s32 256, 256
      %776 = vsyncadd [#allocation3], %s775
      %s777 = sshll.u32 [#allocation2], 4
      %s778 = int_to_ptr.vmem [resolvable:$true] %s777
      %783 = dma.vmem_to_hbm [thread:$0]  %s778, 256, %s8, [#allocation3], 128, 128, 8
    $region37: #{block_forward.1} parent=1 // pred_fallthru
      _
    // Predicated region
    $region38: #{block_forward.1} parent=1 // pred_check
      _
    $region39: #{block_forward.1} parent=1 // pred_check_branch
      %785 = sbr.rel (0) target = $region41
    $region40: #{block_forward.1} parent=1 // pred_region
      %786 = dma.done [#allocation3], 256
    $region41: #{block_forward.1} parent=1 // pred_fallthru
      _
    %787 = vsyncpa [#allocation3], 1

</llo_original>
